<compile_context>
chip_gen: v7x
topology: tpu7x:2x2x1
jax: 0.10.0
libtpu: 0.0.40
codegen_flags: <defaults>
</compile_context>

<pallas_src>
import jax
import jax.numpy as jnp
from jax.experimental import pallas as pl
from jax.experimental.pallas import tpu as pltpu


# ----------------------------- Pallas kernel ------------------------------- #
def _patch_embed_kernel(w_ref, x_ref, b_ref, o_ref):
    # w_ref: (D, K)  bf16   (resident across the whole grid)
    # x_ref: (K, TN) bf16   (spatial tile of the K-major patch matrix)
    # b_ref: (D, 1)  f32    (resident)
    # o_ref: (D, TN) bf16   (lane-dense output tile, NCHW-ready)
    acc = jnp.dot(w_ref[...], x_ref[...], preferred_element_type=jnp.float32)
    o_ref[...] = (acc + b_ref[...]).astype(o_ref.dtype)


_LANE = 128
_TN_CAP = 8192  # multiple of 128; double-buffered tiles stay ~3 MiB of VMEM


def _round_up(v, m):
    return ((v + m - 1) // m) * m


def _choose_spatial_tile(n):
    # Always a multiple of 128 (lane-dense, unmasked in-kernel stores).
    # Ragged / small N is handled by pl.cdiv + Pallas partial-block writeback;
    # never fall back to a single full-N tile (scoped-VMEM hazard).
    return min(_round_up(n, _LANE), _TN_CAP)


def _patch_embed_matmul(w, x, b, out_dtype):
    """w: (D, K) bf16, x: (B, K, N) bf16, b: (D, 1) f32 -> (B, D, N) out_dtype."""
    D, K = w.shape
    B, _, N = x.shape
    TN = _choose_spatial_tile(N)
    grid = (B, pl.cdiv(N, TN))

    out_itemsize = jnp.dtype(out_dtype).itemsize
    cost = pl.CostEstimate(
        flops=2 * B * N * K * D,
        transcendentals=0,
        bytes_accessed=(x.size * x.dtype.itemsize
                        + w.size * w.dtype.itemsize
                        + b.size * b.dtype.itemsize
                        + B * D * N * out_itemsize),
    )

    return pl.pallas_call(
        _patch_embed_kernel,
        out_shape=jax.ShapeDtypeStruct((B, D, N), out_dtype),
        grid=grid,
        in_specs=[
            pl.BlockSpec((D, K), lambda bi, j: (0, 0)),             # weight, resident
            pl.BlockSpec((None, K, TN), lambda bi, j: (bi, 0, j)),  # patch tile
            pl.BlockSpec((D, 1), lambda bi, j: (0, 0)),             # bias, resident
        ],
        out_specs=pl.BlockSpec((None, D, TN), lambda bi, j: (bi, 0, j)),
        compiler_params=pltpu.CompilerParams(
            dimension_semantics=("parallel", "parallel")),
        cost_estimate=cost,
    )(w, x, b)


# ------------------------------ Backbone ------------------------------------ #
class PatchEmbedBackbone:
    """Concrete Backbone: Conv2d(C_in, dim, kernel=patch, stride=patch) via Pallas."""

    def __init__(self, in_channels=4, dim=32, patch_size=4, key=None,
                 out_dtype=jnp.bfloat16):
        self.in_channels = in_channels
        self.dim = dim
        self.patch_size = patch_size
        # Documented precision contract: bf16 MXU inputs, f32 accumulation,
        # bf16 feature-map output (set out_dtype=jnp.float32 if required).
        self.out_dtype = out_dtype
        key = jax.random.PRNGKey(42) if key is None else key
        kw, kb = jax.random.split(key)
        fan_in = in_channels * patch_size * patch_size
        # PyTorch conv weight layout (D, C, P, P); deterministic init.
        self.conv_weight = (
            jax.random.normal(kw, (dim, in_channels, patch_size, patch_size),
                              jnp.float32)
            / jnp.sqrt(jnp.float32(fan_in))
        )
        self.conv_bias = jax.random.normal(kb, (dim,), jnp.float32) * 0.01

    def get_dimension(self):
        return self.dim

    def get_out_size(self, in_size):
        return in_size // self.patch_size

    def get_transform(self):
        return None

    def forward(self, x):
        # x: NCHW (B, C, H, W)
        B, C, H, W = x.shape
        P = self.patch_size
        assert C == self.in_channels and H % P == 0 and W % P == 0
        Hp, Wp = H // P, W // P
        N = Hp * Wp
        K = C * P * P
        D = self.dim

        # Cast to bf16 FIRST, then K-major patch extraction in a single
        # (XLA-fused) convert+transpose pass over 2-byte elements.
        # (B,C,H,W) -> (B,C,Hp,P,Wp,P) -> (B,C,P,P,Hp,Wp) -> (B,K,N)
        xk = x.astype(jnp.bfloat16).reshape(B, C, Hp, P, Wp, P)
        xk = jnp.transpose(xk, (0, 1, 3, 5, 2, 4)).reshape(B, K, N)

        # Weight (D,C,P,P) -> (D,K); K ordering (C, Ph, Pw) matches patches.
        w = self.conv_weight.reshape(D, K).astype(jnp.bfloat16)
        b = self.conv_bias.reshape(D, 1).astype(jnp.float32)

        # Hot path: transposed matmul + bias in the Pallas kernel -> (B, D, N).
        out = _patch_embed_matmul(w, xk, b, self.out_dtype)

        # Directly NCHW — no output transpose needed.
        return out.reshape(B, D, Hp, Wp)

    def __call__(self, x):
        return self.forward(x)


# ------------------------------ reference ----------------------------------- #
def _reference_conv(x, weight, bias, patch):
    # NCHW conv with kernel = stride = patch (f32 math).
    return jax.lax.conv_general_dilated(
        x.astype(jnp.float32),
        weight.astype(jnp.float32),
        window_strides=(patch, patch),
        padding="VALID",
        dimension_numbers=("NCHW", "OIHW", "NCHW"),
    ) + bias.reshape(1, -1, 1, 1)


if __name__ == "__main__":
    key = jax.random.PRNGKey(0)
    B, C, H, W = 2, 4, 16, 16
    x = jax.random.normal(key, (B, C, H, W), jnp.float32)

    backbone = PatchEmbedBackbone(in_channels=C, dim=32, patch_size=4,
                                  key=jax.random.PRNGKey(42))

    fwd = jax.jit(backbone.forward)
    out = jax.block_until_ready(fwd(x))

    # Interface / shape check.
    assert out.shape == (B, backbone.get_dimension(),
                         backbone.get_out_size(H), backbone.get_out_size(W))
    out_f32 = out.astype(jnp.float32)

    # Tight check: reference conv with the same bf16 input rounding (f32 math).
    # Residual diff = bf16 output rounding + accumulation-order effects.
    ref_bf16 = jax.block_until_ready(_reference_conv(
        x.astype(jnp.bfloat16).astype(jnp.float32),
        backbone.conv_weight.astype(jnp.bfloat16).astype(jnp.float32),
        backbone.conv_bias, backbone.patch_size))
    assert jnp.allclose(out_f32, ref_bf16, atol=3e-2, rtol=3e-2), \
        "mismatch vs bf16-rounded reference conv"

    # Loose check: full-precision f32 reference (bf16 in/out => ~few e-2 tol).
    ref_f32 = jax.block_until_ready(_reference_conv(
        x, backbone.conv_weight, backbone.conv_bias, backbone.patch_size))
    assert jnp.allclose(out_f32, ref_f32, atol=6e-2, rtol=6e-2), \
        "mismatch vs f32 reference conv"

    print("KERNEL_OK")
</pallas_src>

<mosaic_0001>
module attributes {stable_mosaic.version = 11 : i64} {
  func.func @_patch_embed_kernel(%arg0: i32, %arg1: i32, %arg2: memref<32x64xbf16, #tpu.memory_space<vmem>>, %arg3: memref<1x64x128xbf16, #tpu.memory_space<vmem>>, %arg4: memref<32x1xf32, #tpu.memory_space<vmem>>, %arg5: memref<1x32x128xbf16, #tpu.memory_space<vmem>>) attributes {dimension_semantics = [#tpu.dimension_semantics<parallel>, #tpu.dimension_semantics<parallel>], iteration_bounds = array<i64: 2, 1>, scalar_prefetch = 0 : i64, scratch_operands = 0 : i64, tpu.core_type = #tpu.core_type<tc>, window_params = [{pipeline_mode = #tpu.pipeline_mode<synchronous>, transform_indices = @transform_0, window_bounds = array<i64: 32, 64>}, {transform_indices = @transform_1, window_bounds = array<i64: 1, 64, 128>}, {pipeline_mode = #tpu.pipeline_mode<synchronous>, transform_indices = @transform_2, window_bounds = array<i64: 32, 1>}, {transform_indices = @transform_3, window_bounds = array<i64: 1, 32, 128>}]} {
    %c0 = arith.constant 0 : index
    %c0_0 = arith.constant 0 : index
    %0 = vector.load %arg2[%c0, %c0_0] : memref<32x64xbf16, #tpu.memory_space<vmem>>, vector<32x64xbf16>
    %c0_1 = arith.constant 0 : index
    %c0_2 = arith.constant 0 : index
    %c0_3 = arith.constant 0 : index
    %1 = vector.load %arg3[%c0_1, %c0_2, %c0_3] : memref<1x64x128xbf16, #tpu.memory_space<vmem>>, vector<1x64x128xbf16>
    %2 = vector.shape_cast %1 : vector<1x64x128xbf16> to vector<64x128xbf16>
    %cst = arith.constant dense<0.000000e+00> : vector<32x128xf32>
    %3 = tpu.matmul %0, %2, %cst {dimension_numbers = #tpu.dot_dimension_numbers<[1], [0], [0], [1], [0, 0, 1, 1], [], []>} : vector<32x64xbf16>, vector<64x128xbf16>, vector<32x128xf32> -> vector<32x128xf32>
    %c0_4 = arith.constant 0 : index
    %c0_5 = arith.constant 0 : index
    %4 = vector.load %arg4[%c0_4, %c0_5] : memref<32x1xf32, #tpu.memory_space<vmem>>, vector<32x1xf32>
    %5 = vector.broadcast %4 : vector<32x1xf32> to vector<32x128xf32>
    %6 = arith.addf %3, %5 : vector<32x128xf32>
    %7 = arith.truncf %6 : vector<32x128xf32> to vector<32x128xbf16>
    %c0_6 = arith.constant 0 : index
    %c0_7 = arith.constant 0 : index
    %c0_8 = arith.constant 0 : index
    %8 = vector.load %arg5[%c0_6, %c0_7, %c0_8] : memref<1x32x128xbf16, #tpu.memory_space<vmem>>, vector<1x32x128xbf16>
    %9 = vector.shape_cast %8 : vector<1x32x128xbf16> to vector<32x128xbf16>
    %10 = vector.shape_cast %7 : vector<32x128xbf16> to vector<1x32x128xbf16>
    tpu.vector_store %arg5[%c0_6, %c0_7, %c0_8], %10 {strides = array<i32>} : memref<1x32x128xbf16, #tpu.memory_space<vmem>>, vector<1x32x128xbf16>,
    return
  }
  func.func @transform_0(%arg0: i32, %arg1: i32) -> (i32, i32) {
    %c0_i32 = arith.constant 0 : i32
    %c0_i32_0 = arith.constant 0 : i32
    %c0_i32_1 = arith.constant 0 : i32
    return %c0_i32, %c0_i32_0 : i32, i32
  }
  func.func @transform_1(%arg0: i32, %arg1: i32) -> (i32, i32, i32) {
    %c0_i32 = arith.constant 0 : i32
    %c0_i32_0 = arith.constant 0 : i32
    return %arg0, %c0_i32, %arg1 : i32, i32, i32
  }
  func.func @transform_2(%arg0: i32, %arg1: i32) -> (i32, i32) {
    %c0_i32 = arith.constant 0 : i32
    %c0_i32_0 = arith.constant 0 : i32
    %c0_i32_1 = arith.constant 0 : i32
    return %c0_i32, %c0_i32_0 : i32, i32
  }
  func.func @transform_3(%arg0: i32, %arg1: i32) -> (i32, i32, i32) {
    %c0_i32 = arith.constant 0 : i32
    %c0_i32_0 = arith.constant 0 : i32
    return %arg0, %c0_i32, %arg1 : i32, i32, i32
  }
}

</mosaic_0001>

<llo_original>
// kernel: forward.1
$region0: #{forward.1}
  #allocation0 [shape = 'u32[]', space=smem, size = 0x4, offset = 0x4, fixed_abs, tag = 'smem constant byte address 0x4 - core index']
  #allocation1 [shape = 'u32[144,128]{1,0:T(1,128)}', space=vmem, size = 0x12000, scoped, tag = 'internal scratch']
  %s0 = inlined_call_operand.vmem [shape: bf16[32,64], index: 0, kind: input, shape index: {}]
  %s1 = inlined_call_operand.vmem [shape: bf16[2,64,16], index: 1, kind: input, shape index: {}]
  %s2 = inlined_call_operand.vmem [shape: f32[32,1], index: 2, kind: input, shape index: {}]
  %s3 = inlined_call_operand.vmem [shape: bf16[2,32,16], index: 3, kind: output, shape index: {}]
  %s4 = sld [smem:[#allocation0]]
  $region45: #{forward.1} parent=0
    _
  %s6 = ssub.s32 1, %s4
  %s7 = scalar_select 0, %s6, %s4
  loop: start=0, step=1, limit=4
  $region2: #{forward.1} parent=0 // loop_pre_header
    _
  $region3: #{forward.1} parent=0 // loop_header
    %s9 = sphi 0, %s13
    %p10 = scmp.ge.s32.totalorder %s9, 4
    %s16 = sphi 0, %s28
    %s17 = sphi 0, %s24
    %s18 = sphi 0, %s16
    %s19 = sphi 0, %s17
    %s20 = sphi 0, %s18
    %s21 = sphi 0, %s19
    %s29 = sphi 0, %s29
    %s31 = sphi 0, %s29
    %s32 = sphi 0, %s31
    %s46 = sphi 0, %s32
    %s54 = sphi 0, %s56
    %s57 = sphi 0, %s54
    %s58 = sphi 0, %s57
    %s74 = sphi 0, %s58
    %s78 = sphi 0, %s78
    %s80 = sphi 0, %s78
    %s81 = sphi 0, %s80
    %s95 = sphi 0, %s81
    %s103 = sphi 0, %s105
    %s106 = sphi 0, %s103
    %s107 = sphi 0, %s106
    %s123 = sphi 0, %s107
  $region4: #{forward.1} parent=0 // loop_header_branch
    %12 = sbr.rel (%p10) target = $region8
  $region5: #{forward.1} parent=0 // loop_body
    %s14 = ssub.s32 %s9, 1
    %s15 = ssub.s32 %s9, 2
    %s22 = sadd.s32 1, %s17
    %p23 = scmp.ge.s32.totalorder %s22, 1
    %s24 = scalar_select %p23, 0, %s22
    %s25 = sadd.s32 1, %s16
    %s26 = scalar_select %p23, %s25, %s16
    %p27 = scmp.ge.s32.totalorder %s26, 2
    %s28 = scalar_select %p27, 0, %s26
    %s30 = sadd.s32 %s29, 1
    %p33 = scmp.eq.s32.totalorder %s9, 1
    %p34 = scmp.ne.s32.totalorder %s29, %s31
    %p35 = scmp.eq.s32.totalorder %s9, 0
    %p36 = por %p34, %p35
    %p37 = scmp.ne.s32.totalorder %s29, %s31
    %p38 = scmp.eq.s32.totalorder %s14, 1
    %p39 = por %p37, %p38
    %p40 = scmp.ne.s32.totalorder %s31, %s32
    %p41 = scmp.eq.s32.totalorder %s14, 0
    %p42 = por %p40, %p41
    %p43 = scmp.ne.s32.totalorder %s31, %s32
    %p44 = scmp.eq.s32.totalorder %s15, 1
    %p45 = por %p43, %p44
    %p47 = scmp.ne.s32.totalorder %s32, %s46
    %p48 = scmp.eq.s32.totalorder %s15, 0
    %p49 = por %p47, %p48
    %s50 = ssub.s32 %s16, %s28
    %s51 = ssub.s32 %s17, %s24
    %s52 = sor.u32 %s50, %s51
    %p53 = scmp.eq.s32.totalorder %s52, 0
    %s55 = sadd.s32 %s54, 1
    %s56 = scalar_select %p53, %s54, %s55
    %p59 = pneg %p53
    %p60 = scmp.eq.s32.totalorder %s9, 1
    %p61 = por %p59, %p60
    %p62 = scmp.ne.s32.totalorder %s54, %s57
    %p63 = scmp.eq.s32.totalorder %s9, 0
    %p64 = por %p62, %p63
    %p65 = scmp.ne.s32.totalorder %s54, %s57
    %p66 = scmp.eq.s32.totalorder %s14, 1
    %p67 = por %p65, %p66
    %p68 = scmp.ne.s32.totalorder %s57, %s58
    %p69 = scmp.eq.s32.totalorder %s14, 0
    %p70 = por %p68, %p69
    %p71 = scmp.ne.s32.totalorder %s57, %s58
    %p72 = scmp.eq.s32.totalorder %s15, 1
    %p73 = por %p71, %p72
    %p75 = scmp.ne.s32.totalorder %s58, %s74
    %p76 = scmp.eq.s32.totalorder %s15, 0
    %p77 = por %p75, %p76
    %s79 = sadd.s32 %s78, 1
    %p82 = scmp.eq.s32.totalorder %s9, 1
    %p83 = scmp.ne.s32.totalorder %s78, %s80
    %p84 = scmp.eq.s32.totalorder %s9, 0
    %p85 = por %p83, %p84
    %p86 = scmp.ne.s32.totalorder %s78, %s80
    %p87 = scmp.eq.s32.totalorder %s14, 1
    %p88 = por %p86, %p87
    %p89 = scmp.ne.s32.totalorder %s80, %s81
    %p90 = scmp.eq.s32.totalorder %s14, 0
    %p91 = por %p89, %p90
    %p92 = scmp.ne.s32.totalorder %s80, %s81
    %p93 = scmp.eq.s32.totalorder %s15, 1
    %p94 = por %p92, %p93
    %p96 = scmp.ne.s32.totalorder %s81, %s95
    %p97 = scmp.eq.s32.totalorder %s15, 0
    %p98 = por %p96, %p97
    %s99 = ssub.s32 %s16, %s28
    %s100 = ssub.s32 %s17, %s24
    %s101 = sor.u32 %s99, %s100
    %p102 = scmp.eq.s32.totalorder %s101, 0
    %s104 = sadd.s32 %s103, 1
    %s105 = scalar_select %p102, %s103, %s104
    %p108 = pneg %p102
    %p109 = scmp.eq.s32.totalorder %s9, 1
    %p110 = por %p108, %p109
    %p111 = scmp.ne.s32.totalorder %s103, %s106
    %p112 = scmp.eq.s32.totalorder %s9, 0
    %p113 = por %p111, %p112
    %p114 = scmp.ne.s32.totalorder %s103, %s106
    %p115 = scmp.eq.s32.totalorder %s14, 1
    %p116 = por %p114, %p115
    %p117 = scmp.ne.s32.totalorder %s106, %s107
    %p118 = scmp.eq.s32.totalorder %s14, 0
    %p119 = por %p117, %p118
    %p120 = scmp.ne.s32.totalorder %s106, %s107
    %p121 = scmp.eq.s32.totalorder %s15, 1
    %p122 = por %p120, %p121
    %p124 = scmp.ne.s32.totalorder %s107, %s123
    %p125 = scmp.eq.s32.totalorder %s15, 0
    %p126 = por %p124, %p125
    %p127 = scmp.le.s32.totalorder 1, %s9
    %p128 = scmp.lt.s32.totalorder %s9, 3
    %p129 = pnand %p127, %p128
    %p130 = pneg %p129
    // Predicated region
    $region9: #{forward.1} parent=5 // pred_check
      _
    $region10: #{forward.1} parent=5 // pred_check_branch
      %132 = sbr.rel (%p129) target = $region12
    $region11: #{forward.1} parent=5 // pred_region
      %s133 = ssub.s32 %s9, 1
      // Predicated region
      $region13: #{forward.1} parent=11 // pred_check
        %p134 = pneg %p42
      $region14: #{forward.1} parent=11 // pred_check_branch
        %136 = sbr.rel (%p134) target = $region16
      $region15: #{forward.1} parent=11 // pred_region
        _
      $region16: #{forward.1} parent=11 // pred_fallthru
        _
      // Predicated region
      $region17: #{forward.1} parent=11 // pred_check
        %p137 = pneg %p91
      $region18: #{forward.1} parent=11 // pred_check_branch
        %139 = sbr.rel (%p137) target = $region20
      $region19: #{forward.1} parent=11 // pred_region
        _
      $region20: #{forward.1} parent=11 // pred_fallthru
        _
    $region12: #{forward.1} parent=5 // pred_fallthru
      _
    %p140 = scmp.lt.s32.totalorder %s9, 2
    // Predicated region
    $region21: #{forward.1} parent=5 // pred_check
      %p141 = pneg %p140
    $region22: #{forward.1} parent=5 // pred_check_branch
      %143 = sbr.rel (%p141) target = $region24
    $region23: #{forward.1} parent=5 // pred_region
      // Predicated region
      $region25: #{forward.1} parent=23 // pred_check
        %p144 = pneg %p64
      $region26: #{forward.1} parent=23 // pred_check_branch
        %146 = sbr.rel (%p144) target = $region28
      $region27: #{forward.1} parent=23 // pred_region
        %p147 = scmp.lt.s32.totalorder %s16, 1
        %s148 = scalar_select %p147, %s16, 1
        %p149 = scmp.lt.s32.totalorder %s17, 0
        %s150 = scalar_select %p149, %s17, 0
        %s151 = smul.addr %s148, 8
        %s152 = sadd.s32 %s150, %s151
        %s153 = smul.addr %s152, 4
        %s154 = scalar_lea.vmem %s1, %s153
      $region28: #{forward.1} parent=23 // pred_fallthru
        _
    $region24: #{forward.1} parent=5 // pred_fallthru
      _
    %p155 = scmp.le.s32.totalorder 1, %s9
    %p156 = scmp.lt.s32.totalorder %s9, 3
    %p157 = pnand %p155, %p156
    %p158 = pneg %p157
    // Predicated region
    $region29: #{forward.1} parent=5 // pred_check
      _
    $region30: #{forward.1} parent=5 // pred_check_branch
      %160 = sbr.rel (%p157) target = $region32
    $region31: #{forward.1} parent=5 // pred_region
      %s161 = ssub.s32 %s9, 1
      %p162 = pneg %p42
      %p163 = pneg %p39
      %p164 = scmp.lt.s32.totalorder %s18, 1
      %s165 = scalar_select %p164, %s18, 1
      %p166 = scmp.lt.s32.totalorder %s19, 0
      %s167 = scalar_select %p166, %s19, 0
      %s168 = smul.addr %s165, 8
      %s169 = sadd.s32 %s167, %s168
      %s170 = smul.addr %s169, 4
      %s171 = scalar_lea.vmem %s1, %s170
      %p172 = pneg %p70
      %p173 = pneg %p67
      %p174 = pneg %p91
      %p175 = pneg %p88
      %p176 = pneg %p119
      %p177 = pneg %p116
      %p178 = scmp.lt.s32.totalorder %s18, 1
      %s179 = scalar_select %p178, %s18, 1
      %p180 = scmp.lt.s32.totalorder %s19, 0
      %s181 = scalar_select %p180, %s19, 0
      %s182 = smul.addr %s179, 4
      %s183 = sadd.s32 %s181, %s182
      %s184 = smul.addr %s183, 4
      %s185 = scalar_lea.vmem %s3, %s184
      %p186 = scmp.lt.s32.totalorder %s18, 1
      %s187 = scalar_select %p186, %s18, 1
      %p188 = scmp.lt.s32.totalorder %s19, 0
      %s189 = scalar_select %p188, %s19, 0
      %s190 = smul.addr %s187, 8
      %s191 = sadd.s32 %s189, %s190
      %s192 = smul.addr %s191, 4
      %s193 = scalar_lea.vmem %s1, %s192
      %p194 = scmp.lt.s32.totalorder %s18, 1
      %s195 = scalar_select %p194, %s18, 1
      %p196 = scmp.lt.s32.totalorder %s19, 0
      %s197 = scalar_select %p196, %s19, 0
      %s198 = smul.addr %s195, 4
      %s199 = sadd.s32 %s197, %s198
      %s200 = smul.addr %s199, 4
      %s201 = scalar_lea.vmem %s3, %s200
      %v203 = vld [vmem:[%s0] sm:$0xf]
      %v204 = vld [vmem:[%s0 + $0x4] sm:$0xf]
      %v205 = vld [vmem:[%s0 + $0x8] sm:$0xf]
      %v206 = vld [vmem:[%s0 + $0xc] sm:$0xf]
      %v207 = vld [vmem:[%s193] sm:$0xf]
      %v208 = vld [vmem:[%s193 + $0x4] sm:$0xf]
      %v209 = vld [vmem:[%s193 + $0x8] sm:$0xf]
      %v210 = vld [vmem:[%s193 + $0xc] sm:$0xf]
      %v211 = vld [vmem:[%s193 + $0x10] sm:$0xf]
      %v212 = vld [vmem:[%s193 + $0x14] sm:$0xf]
      %v213 = vld [vmem:[%s193 + $0x18] sm:$0xf]
      %v214 = vld [vmem:[%s193 + $0x1c] sm:$0xf]
      %v215 = vld [vmem:[%s2] sm:$0xff]
      %v216 = vld [vmem:[%s2 + $0x8] sm:$0xff]
      %v217 = vld [vmem:[%s2 + $0x10] sm:$0xff]
      %v218 = vld [vmem:[%s2 + $0x18] sm:$0xff]
      %220 = vset.pattern.permute.xlu0 0
      %221 = vperm.xlu0 %220, %v215
      %v222 = vpop.permute.xlu0 %221
      %225 = vset.pattern.permute.xlu0 0
      %226 = vperm.xlu0 %225, %v216
      %v227 = vpop.permute.xlu0 %226
      %230 = vset.pattern.permute.xlu0 0
      %231 = vperm.xlu0 %230, %v217
      %v232 = vpop.permute.xlu0 %231
      %235 = vset.pattern.permute.xlu0 0
      %236 = vperm.xlu0 %235, %v218
      %v237 = vpop.permute.xlu0 %236
      %v243 = vunpack.c.l.b16 %v203
      %v244 = vunpack.c.l.b16 %v204
      %v245 = vunpack.c.l.b16 %v205
      %v246 = vunpack.c.l.b16 %v206
      %v247 = vpack.c.b16 %v244, %v243
      %v248 = vpack.c.b16 %v246, %v245
      %v257 = vunpack.c.l.b16 %v207
      %v258 = vunpack.c.l.b16 %v208
      %v259 = vunpack.c.l.b16 %v209
      %v260 = vunpack.c.l.b16 %v210
      %v261 = vunpack.c.l.b16 %v211
      %v262 = vunpack.c.l.b16 %v212
      %v263 = vunpack.c.l.b16 %v213
      %v264 = vunpack.c.l.b16 %v214
      %v265 = vpack.c.b16 %v258, %v257
      %v266 = vpack.c.b16 %v260, %v259
      %v267 = vpack.c.b16 %v262, %v261
      %v268 = vpack.c.b16 %v264, %v263
      %vm273 = vcmask 523264
      %v275 = vsel %vm273, %v247, 0
      %v278 = vsel %vm273, %v248, 0
      %280 = vmatprep.subr.bf16.mxu0 0
      %281 = vmatpush1.bf16.msra.mxu0 %v265
      %282 = vmatprep.subr.bf16.mxu0 0
      %283 = vmatpush1.bf16.msra.mxu0 %v266
      %284 = vmatprep.subr.bf16.mxu0 0
      %285 = vmatpush1.bf16.msra.mxu0 %v267
      %286 = vmatprep.subr.bf16.mxu0 0
      %287 = vmatpush1.bf16.msra.mxu0 %v268
      %288 = vmatprep.subr.bf16.mxu0 0
      %289 = vmatpush1.bf16.msra.mxu0 0
      %290 = vmatprep.subr.bf16.mxu0 0
      %291 = vmatpush1.bf16.msra.mxu0 0
      %292 = vmatprep.subr.bf16.mxu0 0
      %293 = vmatpush1.bf16.msra.mxu0 0
      %294 = vmatprep.subr.bf16.mxu0 0
      %295 = vmatpush1.bf16.msra.mxu0 0
      %296 = vmatprep.subr.bf16.mxu0 0
      %297 = vmatpush1.bf16.msra.mxu0 0
      %298 = vmatprep.subr.bf16.mxu0 0
      %299 = vmatpush1.bf16.msra.mxu0 0
      %300 = vmatprep.subr.bf16.mxu0 0
      %301 = vmatpush1.bf16.msra.mxu0 0
      %302 = vmatprep.subr.bf16.mxu0 0
      %303 = vmatpush1.bf16.msra.mxu0 0
      %304 = vmatprep.subr.bf16.mxu0 0
      %305 = vmatpush1.bf16.msra.mxu0 0
      %306 = vmatprep.subr.bf16.mxu0 0
      %307 = vmatpush1.bf16.msra.mxu0 0
      %308 = vmatprep.subr.bf16.mxu0 0
      %309 = vmatpush1.bf16.msra.mxu0 0
      %310 = vmatprep.subr.bf16.mxu0 0
      %311 = vmatpush1.bf16.msra.mxu0 0
      %312 = vmatprep.mubr.bf16.mxu0 0
      %313 = vmatmul.mubr.bf16.gmra.mrb[0].mxu0 %v275
      %v314 = vpop.f32.mrb[0].mxu0
      %v315 = vadd.f32 %v222, %v314
      %v316 = vpop.f32.mrb[0].mxu0
      %v317 = vpop.f32.mrb[0].mxu0
      %v318 = vadd.f32 %v227, %v317
      %v319 = vpop.f32.mrb[0].mxu0
      %320 = vmatprep.mubr.bf16.mxu0 0
      %321 = vmatmul.mubr.bf16.gmra.mrb[0].mxu0 %v278
      %v322 = vpop.f32.mrb[0].mxu0
      %v323 = vadd.f32 %v232, %v322
      %v324 = vpop.f32.mrb[0].mxu0
      %v325 = vpop.f32.mrb[0].mxu0
      %v326 = vadd.f32 %v237, %v325
      %v327 = vpop.f32.mrb[0].mxu0
      %328 = vdwg.mxu0
      %v329 = vpack.c.bf16 %v318, %v315
      %v330 = vpack.c.bf16 %v326, %v323
      %v333 = vunpack.c.l.b16 %v329
      %v334 = vunpack.c.h.b16 %v329
      %v335 = vunpack.c.l.b16 %v330
      %v336 = vunpack.c.h.b16 %v330
      %v337 = vpack.c.b16 %v333, %v333
      %v338 = vpack.c.b16 %v334, %v334
      %v339 = vpack.c.b16 %v335, %v335
      %v340 = vpack.c.b16 %v336, %v336
      %345 = vst [vmem:[%s201] sm:$0xf] %v337
      %346 = vst [vmem:[%s201 + $0x4] sm:$0xf] %v338
      %347 = vst [vmem:[%s201 + $0x8] sm:$0xf] %v339
      %348 = vst [vmem:[%s201 + $0xc] sm:$0xf] %v340
      %p349 = scmp.lt.s32.totalorder %s18, 1
      %s350 = scalar_select %p349, %s18, 1
      %p351 = scmp.lt.s32.totalorder %s19, 0
      %s352 = scalar_select %p351, %s19, 0
      %s353 = smul.addr %s350, 4
      %s354 = sadd.s32 %s352, %s353
      %s355 = smul.addr %s354, 4
      %s356 = scalar_lea.vmem %s3, %s355
      // Predicated region
      $region33: #{forward.1} parent=31 // pred_check
        %p357 = pneg %p116
      $region34: #{forward.1} parent=31 // pred_check_branch
        %359 = sbr.rel (%p357) target = $region36
      $region35: #{forward.1} parent=31 // pred_region
        _
      $region36: #{forward.1} parent=31 // pred_fallthru
        _
    $region32: #{forward.1} parent=5 // pred_fallthru
      _
    %p360 = scmp.le.s32.totalorder 2, %s9
    // Predicated region
    $region37: #{forward.1} parent=5 // pred_check
      %p361 = pneg %p360
    $region38: #{forward.1} parent=5 // pred_check_branch
      %363 = sbr.rel (%p361) target = $region40
    $region39: #{forward.1} parent=5 // pred_region
      %s364 = ssub.s32 %s9, 2
      // Predicated region
      $region41: #{forward.1} parent=39 // pred_check
        %p365 = pneg %p122
      $region42: #{forward.1} parent=39 // pred_check_branch
        %367 = sbr.rel (%p365) target = $region44
      $region43: #{forward.1} parent=39 // pred_region
        %p368 = scmp.lt.s32.totalorder %s20, 1
        %s369 = scalar_select %p368, %s20, 1
        %p370 = scmp.lt.s32.totalorder %s21, 0
        %s371 = scalar_select %p370, %s21, 0
        %s372 = smul.addr %s369, 4
        %s373 = sadd.s32 %s371, %s372
        %s374 = smul.addr %s373, 4
        %s375 = scalar_lea.vmem %s3, %s374
      $region44: #{forward.1} parent=39 // pred_fallthru
        _
    $region40: #{forward.1} parent=5 // pred_fallthru
      _
  $region6: #{forward.1} parent=0 // loop_footer
    %s13 = sadd.s32 1, %s9
  $region7: #{forward.1} parent=0 // loop_footer_branch
    %8 = sbr.rel target = $region3
  $region8: #{forward.1} parent=0 // loop_exit
    _

</llo_original>
